<compile_context>
chip_gen: v7x
topology: tpu7x:2x2x1
jax: 0.10.0
libtpu: 0.0.40
codegen_flags: <defaults>
</compile_context>

<pallas_src>
import jax
import jax.numpy as jnp
from jax.experimental import pallas as pl
from jax.experimental.pallas import tpu as pltpu

_VMEM_BUDGET_BYTES = 24 * 1024 * 1024   # cap on double-buffered, padded footprint
_VMEM_LIMIT_BYTES = 32 * 1024 * 1024    # explicit scoped-VMEM limit (safe on v5e..v7x)


def _concat_kernel(box_ref, cs_ref, out_ref):
    # Feature axis is the sublane axis -> every store spans the full 128-lane width;
    # sublane offsets are static.  Casts ride the stores on the otherwise-idle VPU.
    out_ref[0:4, :] = box_ref[...].astype(out_ref.dtype)
    out_ref[4:6, :] = cs_ref[...].astype(out_ref.dtype)


def _pick_lane_tile(n, lane_tile, itemsize):
    assert lane_tile > 0 and lane_tile % 128 == 0, "lane_tile must be a multiple of 128"
    # Every block pads to 8 sublanes in VMEM: 3 buffers x 8 sublanes x tile x itemsize,
    # double-buffered.  Cap the tile so that stays under budget (v7x: 64 MiB physical).
    cap = max(128, (_VMEM_BUDGET_BYTES // (2 * 3 * 8 * itemsize)) // 128 * 128)
    lane_tile = min(lane_tile, cap)
    if n <= 128:
        return n                                   # full-extent lane block (always legal)
    if n <= lane_tile:
        # Keep >= 2 grid steps so ("parallel",) actually uses both v7x TensorCores.
        half = pl.cdiv(pl.cdiv(n, 2), 128) * 128
        return min(lane_tile, half)
    return lane_tile


def _merge_feature_major(box_t, cs_t, out_dtype, lane_tile):
    f_box, n = box_t.shape
    f_cs, n2 = cs_t.shape
    assert n == n2, "box / classid+score length mismatch"
    assert f_box == 4 and f_cs == 2, "expected [4,N] boxes and [2,N] classid+score"
    f_out = f_box + f_cs

    tile = _pick_lane_tile(n, lane_tile, jnp.dtype(out_dtype).itemsize)
    grid = (pl.cdiv(n, tile),)

    return pl.pallas_call(
        _concat_kernel,
        out_shape=jax.ShapeDtypeStruct((f_out, n), out_dtype),
        grid=grid,
        in_specs=[
            pl.BlockSpec((f_box, tile), lambda i: (0, i)),
            pl.BlockSpec((f_cs, tile), lambda i: (0, i)),
        ],
        out_specs=pl.BlockSpec((f_out, tile), lambda i: (0, i)),
        compiler_params=pltpu.CompilerParams(
            # Grid steps are independent copies -> shard across v7x's 2 TCs
            # (measured no-op on single-TC v5e/v6e, harmless there).
            dimension_semantics=("parallel",),
            vmem_limit_bytes=_VMEM_LIMIT_BYTES,
        ),
    )(box_t, cs_t)


def nms_outputs_merge_feature_major(box_t, classid_score_t, *, lane_tile=65536):
    """Transpose-free concat in the lane-dense layout: [4,N] ++ [2,N] -> [6,N].

    Intended for NMS pipelines that keep the feature-major layout end-to-end
    (no wrapper transposes, HBM traffic is exactly the 48*N useful bytes)."""
    return _merge_feature_major(box_t, classid_score_t, box_t.dtype, lane_tile)


def nms_outputs_merge(x1y1x2y2, classid, score, *,
                      lane_tile=65536, min_pallas_boxes=8192, force_pallas=False):
    """Pallas equivalent of torch.cat([x1y1x2y2, classid, score], dim=1) -> [N,6]."""
    n, _ = x1y1x2y2.shape
    dtype = x1y1x2y2.dtype
    # torch.cat requires matching dtypes; mirror it by casting to the box dtype.
    # NOTE: class ids stay exact only while they fit the target mantissa
    # (fine for fp32; bf16 rounds ids >= 256).

    if not force_pallas and n < min_pallas_boxes:
        # Small-N fast path: one fused XLA concat beats a Pallas launch + transposes.
        return jnp.concatenate(
            [x1y1x2y2, classid.astype(dtype), score.astype(dtype)], axis=1)

    # Layout plumbing to the lane-dense [F, N] layout.  Standalone this adds HBM
    # traffic; it amortises when this function is jitted into the surrounding NMS
    # pipeline (or avoided entirely via nms_outputs_merge_feature_major).
    box_t = x1y1x2y2.T                                   # [4, N]
    cs_t = jnp.concatenate([classid, score], axis=1).T   # [2, N]
    out_t = _merge_feature_major(box_t, cs_t, dtype, lane_tile)
    return out_t.T                                       # [N, 6]


if __name__ == "__main__":
    key = jax.random.PRNGKey(0)
    k1, k2, k3 = jax.random.split(key, 3)
    N = 300  # number of candidate boxes (not a multiple of the lane tile)
    x1y1x2y2 = jax.random.uniform(k1, (N, 4), dtype=jnp.float32) * 16.0
    classid = jnp.floor(jax.random.uniform(k2, (N, 1), dtype=jnp.float32) * 4.0)
    score = jax.random.uniform(k3, (N, 1), dtype=jnp.float32)

    ref = jnp.concatenate([x1y1x2y2, classid, score], axis=1)

    # Pallas kernel path (forced; small N would otherwise take the XLA fast path).
    out_kernel = jax.block_until_ready(
        nms_outputs_merge(x1y1x2y2, classid, score, force_pallas=True))
    # Auto-dispatch path (small N -> fused XLA concat fast path).
    out_auto = jax.block_until_ready(nms_outputs_merge(x1y1x2y2, classid, score))
    # Transpose-free feature-major path ([6, N] output).
    cs_t = jnp.concatenate([classid, score], axis=1).T
    out_fm = jax.block_until_ready(
        nms_outputs_merge_feature_major(x1y1x2y2.T, cs_t))

    assert out_kernel.shape == (N, 6) and out_auto.shape == (N, 6)
    assert out_fm.shape == (6, N)
    assert jnp.array_equal(out_kernel, ref), "pallas kernel mismatch vs reference"
    assert jnp.array_equal(out_auto, ref), "fast-path mismatch vs reference"
    assert jnp.array_equal(out_fm, ref.T), "feature-major kernel mismatch vs reference"
    print("KERNEL_OK")
</pallas_src>

<mosaic_0001>
module attributes {stable_mosaic.version = 11 : i64} {
  func.func @_concat_kernel(%arg0: i32, %arg1: memref<4x256xf32, #tpu.memory_space<vmem>>, %arg2: memref<2x256xf32, #tpu.memory_space<vmem>>, %arg3: memref<6x256xf32, #tpu.memory_space<vmem>>) attributes {dimension_semantics = [#tpu.dimension_semantics<parallel>], iteration_bounds = array<i64: 2>, scalar_prefetch = 0 : i64, scratch_operands = 0 : i64, tpu.core_type = #tpu.core_type<tc>, window_params = [{transform_indices = @transform_0, window_bounds = array<i64: 4, 256>}, {transform_indices = @transform_1, window_bounds = array<i64: 2, 256>}, {transform_indices = @transform_2, window_bounds = array<i64: 6, 256>}]} {
    %c0 = arith.constant 0 : index
    %c0_0 = arith.constant 0 : index
    %0 = vector.load %arg1[%c0, %c0_0] : memref<4x256xf32, #tpu.memory_space<vmem>>, vector<4x256xf32>
    %c0_1 = arith.constant 0 : index
    %c0_2 = arith.constant 0 : index
    %1 = vector.load %arg3[%c0_1, %c0_2] : memref<6x256xf32, #tpu.memory_space<vmem>>, vector<4x256xf32>
    tpu.vector_store %arg3[%c0_1, %c0_2], %0 {strides = array<i32>} : memref<6x256xf32, #tpu.memory_space<vmem>>, vector<4x256xf32>,
    %c0_3 = arith.constant 0 : index
    %c0_4 = arith.constant 0 : index
    %2 = vector.load %arg2[%c0_3, %c0_4] : memref<2x256xf32, #tpu.memory_space<vmem>>, vector<2x256xf32>
    %c4 = arith.constant 4 : index
    %c0_5 = arith.constant 0 : index
    %3 = vector.load %arg3[%c4, %c0_5] : memref<6x256xf32, #tpu.memory_space<vmem>>, vector<2x256xf32>
    tpu.vector_store %arg3[%c4, %c0_5], %2 {strides = array<i32>} : memref<6x256xf32, #tpu.memory_space<vmem>>, vector<2x256xf32>,
    return
  }
  func.func @transform_0(%arg0: i32) -> (i32, i32) {
    %c0_i32 = arith.constant 0 : i32
    %c0_i32_0 = arith.constant 0 : i32
    return %c0_i32, %arg0 : i32, i32
  }
  func.func @transform_1(%arg0: i32) -> (i32, i32) {
    %c0_i32 = arith.constant 0 : i32
    %c0_i32_0 = arith.constant 0 : i32
    return %c0_i32, %arg0 : i32, i32
  }
  func.func @transform_2(%arg0: i32) -> (i32, i32) {
    %c0_i32 = arith.constant 0 : i32
    %c0_i32_0 = arith.constant 0 : i32
    return %c0_i32, %arg0 : i32, i32
  }
}

</mosaic_0001>

<llo_original>
// kernel: tpu_custom_call.1
$region0: #{tpu_custom_call.1}
  #allocation0 [shape = 'u32[]', space=smem, size = 0x4, offset = 0x4, fixed_abs, tag = 'smem constant byte address 0x4 - core index']
  #allocation1 [shape = 'u32[144,128]{1,0:T(1,128)}', space=vmem, size = 0x12000, scoped, tag = 'internal scratch']
  %s0 = inlined_call_operand.hbm [shape: f32[4,300], index: 0, kind: input, shape index: {}]
  %s1 = inlined_call_operand.hbm [shape: f32[2,300], index: 1, kind: input, shape index: {}]
  %s2 = inlined_call_operand.hbm [shape: f32[6,300], index: 2, kind: output, shape index: {}]
  %s3 = sld [smem:[#allocation0]]
  $region49: #{tpu_custom_call.1} parent=0
    _
  %s5 = ssub.s32 1, %s3
  %s6 = scalar_select 0, %s5, %s3
  $region1: #{tpu_custom_call.1} parent=0
    #allocation2 [shape = 'u8[8192]{0}', space=vmem, size = 0x2000, scoped, tag = 'input window, operand 0']
    #allocation3 [shape = 's32[2]{0}', space=sflag, size = 0x8, scoped, tag = 'scoped memory for tpu_custom_call.1']
    #allocation4 [shape = 's32[2]{0}', space=sflag, size = 0x8, scoped, tag = 'scoped memory for tpu_custom_call.1']
    #allocation5 [shape = 'u8[4096]{0}', space=vmem, size = 0x1000, scoped, tag = 'input window, operand 1']
    #allocation6 [shape = 's32[2]{0}', space=sflag, size = 0x8, scoped, tag = 'scoped memory for tpu_custom_call.1']
    #allocation7 [shape = 'u8[16384]{0}', space=vmem, size = 0x4000, scoped, tag = 'output window, operand 0']
    %7 = vsyncpa [#allocation3], 0
    %s8 = scalar_lea.sflag [#allocation3], 1
    %9 = vsyncpa %s8, 0
    %10 = vsyncpa [#allocation6], 0
    %s11 = scalar_lea.sflag [#allocation6], 1
    %12 = vsyncpa %s11, 0
    %13 = vsyncpa [#allocation4], 0
    %s14 = scalar_lea.sflag [#allocation4], 1
    %15 = vsyncpa %s14, 0
    loop: start=0, step=1, limit=4
    $region2: #{tpu_custom_call.1} parent=1 // loop_pre_header
      _
    $region3: #{tpu_custom_call.1} parent=1 // loop_header
      %s17 = sphi 0, %s21
      %p18 = scmp.ge.s32.totalorder %s17, 4
      %s27 = sphi 0, %s29
      %s30 = sphi 0, %s27
      %s31 = sphi 0, %s30
      %s47 = sphi 0, %s31
      %s53 = sphi 0, %s55
      %s56 = sphi 0, %s53
      %s57 = sphi 0, %s56
      %s73 = sphi 0, %s57
      %s79 = sphi 0, %s81
      %s82 = sphi 0, %s79
      %s83 = sphi 0, %s82
      %s99 = sphi 0, %s83
    $region4: #{tpu_custom_call.1} parent=1 // loop_header_branch
      %20 = sbr.rel (%p18) target = $region8
    $region5: #{tpu_custom_call.1} parent=1 // loop_body
      %s22 = ssub.s32 %s17, 1
      %s23 = ssub.s32 %s17, 2
      %s24 = sadd.s32 %s17, 1
      %s25 = ssub.s32 %s17, %s24
      %p26 = scmp.eq.s32.totalorder %s25, 0
      %s28 = sadd.s32 %s27, 1
      %s29 = scalar_select %p26, %s27, %s28
      %p32 = pneg %p26
      %p33 = scmp.eq.s32.totalorder %s17, 1
      %p34 = por %p32, %p33
      %p35 = scmp.ne.s32.totalorder %s27, %s30
      %p36 = scmp.eq.s32.totalorder %s17, 0
      %p37 = por %p35, %p36
      %p38 = scmp.ne.s32.totalorder %s27, %s30
      %p39 = scmp.eq.s32.totalorder %s22, 1
      %p40 = por %p38, %p39
      %p41 = scmp.ne.s32.totalorder %s30, %s31
      %p42 = scmp.eq.s32.totalorder %s22, 0
      %p43 = por %p41, %p42
      %p44 = scmp.ne.s32.totalorder %s30, %s31
      %p45 = scmp.eq.s32.totalorder %s23, 1
      %p46 = por %p44, %p45
      %p48 = scmp.ne.s32.totalorder %s31, %s47
      %p49 = scmp.eq.s32.totalorder %s23, 0
      %p50 = por %p48, %p49
      %s51 = ssub.s32 %s17, %s24
      %p52 = scmp.eq.s32.totalorder %s51, 0
      %s54 = sadd.s32 %s53, 1
      %s55 = scalar_select %p52, %s53, %s54
      %p58 = pneg %p52
      %p59 = scmp.eq.s32.totalorder %s17, 1
      %p60 = por %p58, %p59
      %p61 = scmp.ne.s32.totalorder %s53, %s56
      %p62 = scmp.eq.s32.totalorder %s17, 0
      %p63 = por %p61, %p62
      %p64 = scmp.ne.s32.totalorder %s53, %s56
      %p65 = scmp.eq.s32.totalorder %s22, 1
      %p66 = por %p64, %p65
      %p67 = scmp.ne.s32.totalorder %s56, %s57
      %p68 = scmp.eq.s32.totalorder %s22, 0
      %p69 = por %p67, %p68
      %p70 = scmp.ne.s32.totalorder %s56, %s57
      %p71 = scmp.eq.s32.totalorder %s23, 1
      %p72 = por %p70, %p71
      %p74 = scmp.ne.s32.totalorder %s57, %s73
      %p75 = scmp.eq.s32.totalorder %s23, 0
      %p76 = por %p74, %p75
      %s77 = ssub.s32 %s17, %s24
      %p78 = scmp.eq.s32.totalorder %s77, 0
      %s80 = sadd.s32 %s79, 1
      %s81 = scalar_select %p78, %s79, %s80
      %p84 = pneg %p78
      %p85 = scmp.eq.s32.totalorder %s17, 1
      %p86 = por %p84, %p85
      %p87 = scmp.ne.s32.totalorder %s79, %s82
      %p88 = scmp.eq.s32.totalorder %s17, 0
      %p89 = por %p87, %p88
      %p90 = scmp.ne.s32.totalorder %s79, %s82
      %p91 = scmp.eq.s32.totalorder %s22, 1
      %p92 = por %p90, %p91
      %p93 = scmp.ne.s32.totalorder %s82, %s83
      %p94 = scmp.eq.s32.totalorder %s22, 0
      %p95 = por %p93, %p94
      %p96 = scmp.ne.s32.totalorder %s82, %s83
      %p97 = scmp.eq.s32.totalorder %s23, 1
      %p98 = por %p96, %p97
      %p100 = scmp.ne.s32.totalorder %s83, %s99
      %p101 = scmp.eq.s32.totalorder %s23, 0
      %p102 = por %p100, %p101
      %p103 = scmp.le.s32.totalorder 1, %s17
      %p104 = scmp.lt.s32.totalorder %s17, 3
      %p105 = pnand %p103, %p104
      %p106 = pneg %p105
      // Predicated region
      $region9: #{tpu_custom_call.1} parent=5 // pred_check
        _
      $region10: #{tpu_custom_call.1} parent=5 // pred_check_branch
        %108 = sbr.rel (%p105) target = $region12
      $region11: #{tpu_custom_call.1} parent=5 // pred_region
        %s109 = ssub.s32 %s17, 1
      $region12: #{tpu_custom_call.1} parent=5 // pred_fallthru
        _
      %p110 = scmp.lt.s32.totalorder %s17, 2
      // Predicated region
      $region13: #{tpu_custom_call.1} parent=5 // pred_check
        %p111 = pneg %p110
      $region14: #{tpu_custom_call.1} parent=5 // pred_check_branch
        %113 = sbr.rel (%p111) target = $region16
      $region15: #{tpu_custom_call.1} parent=5 // pred_region
        // Predicated region
        $region17: #{tpu_custom_call.1} parent=15 // pred_check
          %p114 = pneg %p37
        $region18: #{tpu_custom_call.1} parent=15 // pred_check_branch
          %116 = sbr.rel (%p114) target = $region20
        $region19: #{tpu_custom_call.1} parent=15 // pred_region
          %s117 = sand.u32 %s27, 1
          %s118 = scalar_lea.sflag [#allocation3], %s117
          %s119 = sand.u32 %s27, 1
          %s120 = smul.addr %s119, 8
          %s121 = scalar_lea.vmem [#allocation2], %s120
          %s122 = smul.u32 2, %s17
          %s123 = ssub.s32 3, %s122
          %p124 = scmp.lt.s32.totalorder %s123, 2
          %s125 = scalar_select %p124, %s123, 2
          %s126 = smul.u32 64, %s125
          %s128 = ssub.s32 128, %s126
          %129 = vsyncadd %s118, %s128
          %p130 = scmp.ne.s32.totalorder 0, %s126
          %s131 = smul.addr %s122, 64
          %s132 = scalar_lea.hbm %s0, %s131
          %s133 = smul.u32 %s125, 4
          %s134 = sshll.u32 %s133, 4
          %s135 = sshll.u32 %s121, 4
          %s136 = int_to_ptr.vmem [resolvable:$true] %s135
          %138 = dma.hbm_to_vmem [thread:$0]  (%p130), %s132, %s134, %s136, %s118
        $region20: #{tpu_custom_call.1} parent=15 // pred_fallthru
          _
        // Predicated region
        $region21: #{tpu_custom_call.1} parent=15 // pred_check
          %p139 = pneg %p63
        $region22: #{tpu_custom_call.1} parent=15 // pred_check_branch
          %141 = sbr.rel (%p139) target = $region24
        $region23: #{tpu_custom_call.1} parent=15 // pred_region
          %s142 = sand.u32 %s53, 1
          %s143 = scalar_lea.sflag [#allocation6], %s142
          %s144 = sand.u32 %s53, 1
          %s145 = smul.addr %s144, 4
          %s146 = scalar_lea.vmem [#allocation5], %s145
          %s147 = smul.u32 2, %s17
          %s148 = ssub.s32 3, %s147
          %p149 = scmp.lt.s32.totalorder %s148, 2
          %s150 = scalar_select %p149, %s148, 2
          %s151 = smul.u32 32, %s150
          %s153 = ssub.s32 64, %s151
          %154 = vsyncadd %s143, %s153
          %p155 = scmp.ne.s32.totalorder 0, %s151
          %s156 = smul.addr %s147, 32
          %s157 = scalar_lea.hbm %s1, %s156
          %s158 = smul.u32 %s150, 2
          %s159 = sshll.u32 %s158, 4
          %s160 = sshll.u32 %s146, 4
          %s161 = int_to_ptr.vmem [resolvable:$true] %s160
          %163 = dma.hbm_to_vmem [thread:$0]  (%p155), %s157, %s159, %s161, %s143
        $region24: #{tpu_custom_call.1} parent=15 // pred_fallthru
          _
      $region16: #{tpu_custom_call.1} parent=5 // pred_fallthru
        _
      %p164 = scmp.le.s32.totalorder 1, %s17
      %p165 = scmp.lt.s32.totalorder %s17, 3
      %p166 = pnand %p164, %p165
      %p167 = pneg %p166
      // Predicated region
      $region25: #{tpu_custom_call.1} parent=5 // pred_check
        _
      $region26: #{tpu_custom_call.1} parent=5 // pred_check_branch
        %169 = sbr.rel (%p166) target = $region28
      $region27: #{tpu_custom_call.1} parent=5 // pred_region
        %s170 = ssub.s32 %s17, 1
        %s171 = sand.u32 %s30, 1
        %s172 = scalar_lea.sflag [#allocation3], %s171
        %s173 = sand.u32 %s30, 1
        %s174 = smul.addr %s173, 8
        %s175 = scalar_lea.vmem [#allocation2], %s174
        // Predicated region
        $region29: #{tpu_custom_call.1} parent=27 // pred_check
          %p176 = pneg %p43
        $region30: #{tpu_custom_call.1} parent=27 // pred_check_branch
          %178 = sbr.rel (%p176) target = $region32
        $region31: #{tpu_custom_call.1} parent=27 // pred_region
          %179 = dma.done %s172, 128
        $region32: #{tpu_custom_call.1} parent=27 // pred_fallthru
          _
        %s180 = sand.u32 %s56, 1
        %s181 = scalar_lea.sflag [#allocation6], %s180
        %s182 = sand.u32 %s56, 1
        %s183 = smul.addr %s182, 4
        %s184 = scalar_lea.vmem [#allocation5], %s183
        // Predicated region
        $region33: #{tpu_custom_call.1} parent=27 // pred_check
          %p185 = pneg %p69
        $region34: #{tpu_custom_call.1} parent=27 // pred_check_branch
          %187 = sbr.rel (%p185) target = $region36
        $region35: #{tpu_custom_call.1} parent=27 // pred_region
          %188 = dma.done %s181, 64
        $region36: #{tpu_custom_call.1} parent=27 // pred_fallthru
          _
        %s189 = sand.u32 %s30, 1
        %s190 = scalar_lea.sflag [#allocation3], %s189
        %s191 = sand.u32 %s30, 1
        %s192 = smul.addr %s191, 8
        %s193 = scalar_lea.vmem [#allocation2], %s192
        %p194 = pneg %p43
        %p195 = pneg %p40
        %s196 = sand.u32 %s56, 1
        %s197 = scalar_lea.sflag [#allocation6], %s196
        %s198 = sand.u32 %s56, 1
        %s199 = smul.addr %s198, 4
        %s200 = scalar_lea.vmem [#allocation5], %s199
        %p201 = pneg %p69
        %p202 = pneg %p66
        %p203 = pneg %p95
        %p204 = pneg %p92
        %s205 = sand.u32 %s82, 1
        %s206 = scalar_lea.sflag [#allocation4], %s205
        %s207 = sand.u32 %s82, 1
        %s208 = smul.addr %s207, 16
        %s209 = scalar_lea.vmem [#allocation7], %s208
        %s210 = smul.u32 2, %s22
        %s211 = ssub.s32 3, %s210
        %p212 = scmp.lt.s32.totalorder %s211, 2
        %s213 = scalar_select %p212, %s211, 2
        %s214 = smul.u32 64, %s213
        %s215 = smul.u32 2, %s22
        %s216 = ssub.s32 3, %s215
        %p217 = scmp.lt.s32.totalorder %s216, 2
        %s218 = scalar_select %p217, %s216, 2
        %s219 = smul.u32 32, %s218
        %s220 = smul.u32 2, %s22
        %s221 = ssub.s32 3, %s220
        %p222 = scmp.lt.s32.totalorder %s221, 2
        %s223 = scalar_select %p222, %s221, 2
        %s224 = smul.u32 128, %s223
        %v225 = vld [vmem:[%s175] sm:$0xff]
        %v227 = vcombine.high %v225, %v225
        %229 = vst [vmem:[%s209] sm:$0xf] %v225
        %230 = vst [vmem:[%s209 + $0x8] sm:$0xf] %v227
        %v231 = vld [vmem:[%s184] sm:$0xf]
        %v234 = vunpack.c.l.s4 1983009808
        %v235 = vunpack.c.0.s8 %v234
        %v236 = vlaneseq
        %v237 = vshrl.u32 %v236, 7
        %v238 = vsub.s32 %v235, %v237
        %v239 = vrot.slane %v231, %v238
        %v240 = vcombine.low %v239, %v239
        %243 = vst [vmem:[%s209] sm:$0x30] %v240
        %244 = vst [vmem:[%s209 + $0x8] sm:$0x30] %v239
        %s245 = sand.u32 %s82, 1
        %s246 = scalar_lea.sflag [#allocation4], %s245
        %s247 = sand.u32 %s82, 1
        %s248 = smul.addr %s247, 16
        %s249 = scalar_lea.vmem [#allocation7], %s248
        // Predicated region
        $region37: #{tpu_custom_call.1} parent=27 // pred_check
          %p250 = pneg %p92
        $region38: #{tpu_custom_call.1} parent=27 // pred_check_branch
          %252 = sbr.rel (%p250) target = $region40
        $region39: #{tpu_custom_call.1} parent=27 // pred_region
          %s253 = smul.u32 2, %s22
          %s254 = ssub.s32 3, %s253
          %p255 = scmp.lt.s32.totalorder %s254, 2
          %s256 = scalar_select %p255, %s254, 2
          %s257 = smul.u32 128, %s256
          %s259 = ssub.s32 256, %s257
          %260 = vsyncadd %s246, %s259
          %p261 = scmp.ne.s32.totalorder 0, %s257
          %s262 = smul.addr %s253, 128
          %s263 = scalar_lea.hbm %s2, %s262
          %s264 = smul.u32 %s256, 8
          %s265 = sshll.u32 %s264, 4
          %s266 = sshll.u32 %s249, 4
          %s267 = int_to_ptr.vmem [resolvable:$true] %s266
          %269 = dma.vmem_to_hbm [thread:$0]  (%p261), %s267, %s265, %s263, %s246
        $region40: #{tpu_custom_call.1} parent=27 // pred_fallthru
          _
      $region28: #{tpu_custom_call.1} parent=5 // pred_fallthru
        _
      %p270 = scmp.le.s32.totalorder 2, %s17
      // Predicated region
      $region41: #{tpu_custom_call.1} parent=5 // pred_check
        %p271 = pneg %p270
      $region42: #{tpu_custom_call.1} parent=5 // pred_check_branch
        %273 = sbr.rel (%p271) target = $region44
      $region43: #{tpu_custom_call.1} parent=5 // pred_region
        %s274 = ssub.s32 %s17, 2
        // Predicated region
        $region45: #{tpu_custom_call.1} parent=43 // pred_check
          %p275 = pneg %p98
        $region46: #{tpu_custom_call.1} parent=43 // pred_check_branch
          %277 = sbr.rel (%p275) target = $region48
        $region47: #{tpu_custom_call.1} parent=43 // pred_region
          %s278 = sand.u32 %s83, 1
          %s279 = scalar_lea.sflag [#allocation4], %s278
          %s280 = sand.u32 %s83, 1
          %s281 = smul.addr %s280, 16
          %s282 = scalar_lea.vmem [#allocation7], %s281
          %283 = dma.done %s279, 256
        $region48: #{tpu_custom_call.1} parent=43 // pred_fallthru
          _
      $region44: #{tpu_custom_call.1} parent=5 // pred_fallthru
        _
    $region6: #{tpu_custom_call.1} parent=1 // loop_footer
      %s21 = sadd.s32 1, %s17
    $region7: #{tpu_custom_call.1} parent=1 // loop_footer_branch
      %16 = sbr.rel target = $region3
    $region8: #{tpu_custom_call.1} parent=1 // loop_exit
      _
    %284 = vsyncpa [#allocation3], 1
    %s285 = scalar_lea.sflag [#allocation3], 1
    %286 = vsyncpa %s285, 1
    %287 = vsyncpa [#allocation6], 1
    %s288 = scalar_lea.sflag [#allocation6], 1
    %289 = vsyncpa %s288, 1
    %290 = vsyncpa [#allocation4], 1
    %s291 = scalar_lea.sflag [#allocation4], 1
    %292 = vsyncpa %s291, 1

</llo_original>
